<compile_context>
chip_gen: v7x
topology: tpu7x:2x2x1
jax: 0.10.0
libtpu: 0.0.40
codegen_flags: <defaults>
</compile_context>

<pallas_src>
import jax
import jax.numpy as jnp
from jax.experimental import pallas as pl
from jax.experimental.pallas import tpu as pltpu

INPUT_LEN = 240
KERNEL_SIZE = 25
PRED_LEN = 1
PAD = (KERNEL_SIZE - 1) // 2  # 12


# ----------------------------------------------------------------------------
# Parameter folding (exact; runs once per call, size independent of batch).
# ----------------------------------------------------------------------------
def fold_dlinear_params(w_season, b_season, w_trend, b_trend):
    """Fold edge-pad + stride-1 moving-average decomposition + both Linear
    heads into a single (PRED_LEN, INPUT_LEN) weight row and a (PRED_LEN,) bias.

    out = season @ Ws^T + trend @ Wt^T + bs + bt
        = x @ Ws^T + MA(x) @ (Wt - Ws)^T + (bs + bt)
    and MA(x) (edge-replicated, stride-1 average pool) is itself a linear map
    of x, so the whole model is a single Linear(INPUT_LEN -> PRED_LEN)."""
    ws_t = w_season.astype(jnp.float32).T                 # (L, P)
    d_t = (w_trend - w_season).astype(jnp.float32).T      # (L, P)

    # Weight seen by the edge-padded series x_pad (length Lp = L + k - 1):
    #   direct term (x @ Ws^T): Ws^T placed at offset PAD,
    #   moving-average term:    (1/k) * sum over the k window shifts of D^T.
    w_direct = jnp.pad(ws_t, ((PAD, PAD), (0, 0)))         # (Lp, P)
    w_ma = sum(
        jnp.pad(d_t, ((j, KERNEL_SIZE - 1 - j), (0, 0)))
        for j in range(KERNEL_SIZE)) / KERNEL_SIZE         # (Lp, P)
    w_pad = w_direct + w_ma                                # (Lp, P)

    # Collapse the edge replication: x_pad[:, :PAD] == x[:, :1] and
    # x_pad[:, PAD+L:] == x[:, -1:], so their weights fold onto rows 0 / L-1.
    w = w_pad[PAD:PAD + INPUT_LEN]                         # (L, P)
    w = w.at[0].add(w_pad[:PAD].sum(axis=0))
    w = w.at[INPUT_LEN - 1].add(w_pad[PAD + INPUT_LEN:].sum(axis=0))

    b = (b_season + b_trend).reshape(PRED_LEN).astype(jnp.float32)  # (P,)
    return w.T, b                                          # (P, L), (P,)


# ----------------------------------------------------------------------------
# Kernel: per batch tile, f32 VPU multiply + XLU lane-reduce + SMEM bias.
# ----------------------------------------------------------------------------
def dlinear_kernel(x_ref, w_ref, b_ref, o_ref):
    x = x_ref[...].astype(jnp.float32)          # (tb, L); cast is in-register
    w = w_ref[...]                              # (1, L) f32, sublane broadcast
    acc = jnp.sum(x * w, axis=-1, keepdims=True)   # (tb, 1): VPU mul + XLU reduce
    o_ref[...] = (acc + b_ref[0]).astype(o_ref.dtype)


def _pick_batch_tile(B, max_tb=2048):
    """Largest useful batch tile; guarantee >= 2 grid blocks for medium B so
    both v7x TensorCores get work (harmless on single-TC v5e/v6e)."""
    if B <= 16:
        return B
    if B <= 2 * max_tb:
        half = pl.cdiv(B, 2)
        return ((half + 7) // 8) * 8
    return max_tb


def dlinear_forward(x, w_season, b_season, w_trend, b_trend, *, tb=None):
    """x: (B, INPUT_LEN) in any float dtype.  Weights in PyTorch Linear
    convention: w_*: (PRED_LEN, INPUT_LEN), b_*: (PRED_LEN,).
    Returns (B, PRED_LEN) float32."""
    B, L = x.shape
    assert L == INPUT_LEN

    w_row, b = fold_dlinear_params(w_season, b_season, w_trend, b_trend)

    if tb is None:
        tb = _pick_batch_tile(B)
    tb = min(tb, B)
    n_blocks = pl.cdiv(B, tb)   # last block may be partial: stores are masked

    itemsize = jnp.dtype(x.dtype).itemsize
    cost = pl.CostEstimate(
        flops=2 * B * INPUT_LEN * PRED_LEN,
        transcendentals=0,
        bytes_accessed=(B * INPUT_LEN * itemsize
                        + INPUT_LEN * PRED_LEN * 4
                        + PRED_LEN * 4
                        + B * PRED_LEN * 4),
    )

    return pl.pallas_call(
        dlinear_kernel,
        out_shape=jax.ShapeDtypeStruct((B, PRED_LEN), jnp.float32),
        grid=(n_blocks,),
        in_specs=[
            pl.BlockSpec((tb, INPUT_LEN), lambda i: (i, 0)),         # x tile
            pl.BlockSpec((PRED_LEN, INPUT_LEN), lambda i: (0, 0)),   # folded W row
            pl.BlockSpec(memory_space=pltpu.MemorySpace.SMEM),       # folded bias
        ],
        out_specs=pl.BlockSpec((tb, PRED_LEN), lambda i: (i, 0)),
        compiler_params=pltpu.CompilerParams(
            dimension_semantics=("parallel",)),   # megacore split over batch
        cost_estimate=cost,
    )(x, w_row, b)


# ----------------------------------------------------------------------------
# Pure-JAX reference mirroring the PyTorch module (un-fused math, f32).
# ----------------------------------------------------------------------------
def dlinear_reference(x, w_season, b_season, w_trend, b_trend):
    x = x.astype(jnp.float32)
    x_pad = jnp.pad(x, ((0, 0), (PAD, PAD)), mode="edge")
    windows = jnp.stack(
        [x_pad[:, j:j + INPUT_LEN] for j in range(KERNEL_SIZE)], axis=0)
    moving_mean = windows.mean(axis=0)
    season = x - moving_mean
    hp = jax.lax.Precision.HIGHEST
    return (jnp.dot(season, w_season.T, precision=hp) + b_season
            + jnp.dot(moving_mean, w_trend.T, precision=hp) + b_trend)


if __name__ == "__main__":
    # B deliberately NOT a multiple of the chosen batch tile (tb=16 here), so
    # the run exercises the partial-final-block / masked-store path that
    # replaced the wrapper-side padding copy.
    B = 20
    key = jax.random.PRNGKey(0)
    kx, kws, kbs, kwt, kbt = jax.random.split(key, 5)

    x = jax.random.normal(kx, (B, INPUT_LEN), dtype=jnp.float32)

    # Deterministic parameter init (PyTorch Linear-style uniform bound).
    bound = 1.0 / (INPUT_LEN ** 0.5)
    w_season = jax.random.uniform(kws, (PRED_LEN, INPUT_LEN), jnp.float32, -bound, bound)
    b_season = jax.random.uniform(kbs, (PRED_LEN,), jnp.float32, -bound, bound)
    w_trend = jax.random.uniform(kwt, (PRED_LEN, INPUT_LEN), jnp.float32, -bound, bound)
    b_trend = jax.random.uniform(kbt, (PRED_LEN,), jnp.float32, -bound, bound)

    out = jax.block_until_ready(
        dlinear_forward(x, w_season, b_season, w_trend, b_trend))
    ref = dlinear_reference(x, w_season, b_season, w_trend, b_trend)

    assert out.shape == (B, PRED_LEN), out.shape
    assert jnp.allclose(out, ref, atol=1e-4, rtol=1e-4), (out, ref)

    print("KERNEL_OK")
</pallas_src>

<mosaic_0001>
module attributes {stable_mosaic.version = 11 : i64} {
  func.func @dlinear_kernel(%arg0: i32, %arg1: memref<16x240xf32, #tpu.memory_space<vmem>>, %arg2: memref<1x240xf32, #tpu.memory_space<vmem>>, %arg3: memref<1xf32, #tpu.memory_space<smem>>, %arg4: memref<16x1xf32, #tpu.memory_space<vmem>>) attributes {dimension_semantics = [#tpu.dimension_semantics<parallel>], iteration_bounds = array<i64: 2>, scalar_prefetch = 0 : i64, scratch_operands = 0 : i64, tpu.core_type = #tpu.core_type<tc>, window_params = [{transform_indices = @transform_0, window_bounds = array<i64: 16, 240>}, {pipeline_mode = #tpu.pipeline_mode<synchronous>, transform_indices = @transform_1, window_bounds = array<i64: 1, 240>}, {transform_indices = @transform_2, window_bounds = array<i64: 1>}, {transform_indices = @transform_3, window_bounds = array<i64: 16, 1>}]} {
    %c0 = arith.constant 0 : index
    %c0_0 = arith.constant 0 : index
    %0 = vector.load %arg1[%c0, %c0_0] : memref<16x240xf32, #tpu.memory_space<vmem>>, vector<16x240xf32>
    %c0_1 = arith.constant 0 : index
    %c0_2 = arith.constant 0 : index
    %1 = vector.load %arg2[%c0_1, %c0_2] : memref<1x240xf32, #tpu.memory_space<vmem>>, vector<1x240xf32>
    %2 = vector.broadcast %1 : vector<1x240xf32> to vector<16x240xf32>
    %3 = arith.mulf %0, %2 : vector<16x240xf32>
    %cst = arith.constant dense<0.000000e+00> : vector<16xf32>
    %4 = vector.multi_reduction <add>, %3, %cst [1] : vector<16x240xf32> to vector<16xf32>
    %5 = vector.shape_cast %4 : vector<16xf32> to vector<16x1xf32>
    %c0_3 = arith.constant 0 : index
    %6 = memref.load %arg3[%c0_3] : memref<1xf32, #tpu.memory_space<smem>>
    %7 = vector.broadcast %6 : f32 to vector<16x1xf32>
    %8 = arith.addf %5, %7 : vector<16x1xf32>
    %c0_4 = arith.constant 0 : index
    %c0_5 = arith.constant 0 : index
    %9 = vector.load %arg4[%c0_4, %c0_5] : memref<16x1xf32, #tpu.memory_space<vmem>>, vector<16x1xf32>
    tpu.vector_store %arg4[%c0_4, %c0_5], %8 {strides = array<i32>} : memref<16x1xf32, #tpu.memory_space<vmem>>, vector<16x1xf32>,
    return
  }
  func.func @transform_0(%arg0: i32) -> (i32, i32) {
    %c0_i32 = arith.constant 0 : i32
    %c0_i32_0 = arith.constant 0 : i32
    return %arg0, %c0_i32 : i32, i32
  }
  func.func @transform_1(%arg0: i32) -> (i32, i32) {
    %c0_i32 = arith.constant 0 : i32
    %c0_i32_0 = arith.constant 0 : i32
    %c0_i32_1 = arith.constant 0 : i32
    return %c0_i32, %c0_i32_0 : i32, i32
  }
  func.func @transform_2(%arg0: i32) -> i32 {
    %c0_i32 = arith.constant 0 : i32
    %c0_i32_0 = arith.constant 0 : i32
    return %c0_i32 : i32
  }
  func.func @transform_3(%arg0: i32) -> (i32, i32) {
    %c0_i32 = arith.constant 0 : i32
    %c0_i32_0 = arith.constant 0 : i32
    return %arg0, %c0_i32 : i32, i32
  }
}

</mosaic_0001>

<llo_original>
// kernel: tpu_custom_call.1
$region0: #{tpu_custom_call.1}
  #allocation0 [shape = 'u32[]', space=smem, size = 0x4, offset = 0x4, fixed_abs, tag = 'smem constant byte address 0x4 - core index']
  #allocation1 [shape = 'u32[144,128]{1,0:T(1,128)}', space=vmem, size = 0x12000, scoped, tag = 'internal scratch']
  #allocation2 [shape = 'f32[1]{0:T(128)S(6)}', space=smem, size = 0x200, scoped, tag = 'scoped memory for tpu_custom_call.1']
  %s0 = inlined_call_operand.hbm [shape: f32[20,240], index: 0, kind: input, shape index: {}]
  %s1 = inlined_call_operand.vmem [shape: f32[1,240], index: 1, kind: input, shape index: {}]
  %s2 = inlined_call_operand.<no memory space> [shape: f32[1], index: 2, kind: input, shape index: {}]
  %s3 = inlined_call_operand.vmem [shape: f32[20,1], index: 3, kind: output, shape index: {}]
  %s4 = sld [smem:[#allocation0]]
  $region97: #{tpu_custom_call.1} parent=0
    _
  %s6 = ssub.s32 1, %s4
  %s7 = scalar_select 0, %s6, %s4
  %8 = sst [smem:[#allocation2]] %s2
  $region1: #{tpu_custom_call.1} parent=0
    #allocation3 [shape = 'u8[32768]{0}', space=vmem, size = 0x8000, scoped, tag = 'input window, operand 0']
    #allocation4 [shape = 's32[2]{0}', space=sflag, size = 0x8, scoped, tag = 'scoped memory for tpu_custom_call.1']
    #allocation5 [shape = 'u8[16384]{0}', space=vmem, size = 0x4000, scoped, tag = 'output window, operand 0']
    %9 = vsyncpa [#allocation4], 0
    %s10 = scalar_lea.sflag [#allocation4], 1
    %11 = vsyncpa %s10, 0
    loop: start=0, step=1, limit=4
    $region2: #{tpu_custom_call.1} parent=1 // loop_pre_header
      _
    $region3: #{tpu_custom_call.1} parent=1 // loop_header
      %s13 = sphi 0, %s17
      %p14 = scmp.ge.s32.totalorder %s13, 4
      %s23 = sphi 0, %s25
      %s26 = sphi 0, %s23
      %s27 = sphi 0, %s26
      %s43 = sphi 0, %s27
      %s47 = sphi 0, %s47
      %s49 = sphi 0, %s47
      %s50 = sphi 0, %s49
      %s64 = sphi 0, %s50
      %s68 = sphi 0, %s68
      %s70 = sphi 0, %s68
      %s71 = sphi 0, %s70
      %s85 = sphi 0, %s71
      %s91 = sphi 0, %s93
      %s94 = sphi 0, %s91
      %s95 = sphi 0, %s94
      %s111 = sphi 0, %s95
    $region4: #{tpu_custom_call.1} parent=1 // loop_header_branch
      %16 = sbr.rel (%p14) target = $region8
    $region5: #{tpu_custom_call.1} parent=1 // loop_body
      %s18 = ssub.s32 %s13, 1
      %s19 = ssub.s32 %s13, 2
      %s20 = sadd.s32 %s13, 1
      %s21 = ssub.s32 %s13, %s20
      %p22 = scmp.eq.s32.totalorder %s21, 0
      %s24 = sadd.s32 %s23, 1
      %s25 = scalar_select %p22, %s23, %s24
      %p28 = pneg %p22
      %p29 = scmp.eq.s32.totalorder %s13, 1
      %p30 = por %p28, %p29
      %p31 = scmp.ne.s32.totalorder %s23, %s26
      %p32 = scmp.eq.s32.totalorder %s13, 0
      %p33 = por %p31, %p32
      %p34 = scmp.ne.s32.totalorder %s23, %s26
      %p35 = scmp.eq.s32.totalorder %s18, 1
      %p36 = por %p34, %p35
      %p37 = scmp.ne.s32.totalorder %s26, %s27
      %p38 = scmp.eq.s32.totalorder %s18, 0
      %p39 = por %p37, %p38
      %p40 = scmp.ne.s32.totalorder %s26, %s27
      %p41 = scmp.eq.s32.totalorder %s19, 1
      %p42 = por %p40, %p41
      %p44 = scmp.ne.s32.totalorder %s27, %s43
      %p45 = scmp.eq.s32.totalorder %s19, 0
      %p46 = por %p44, %p45
      %s48 = sadd.s32 %s47, 1
      %p51 = scmp.eq.s32.totalorder %s13, 1
      %p52 = scmp.ne.s32.totalorder %s47, %s49
      %p53 = scmp.eq.s32.totalorder %s13, 0
      %p54 = por %p52, %p53
      %p55 = scmp.ne.s32.totalorder %s47, %s49
      %p56 = scmp.eq.s32.totalorder %s18, 1
      %p57 = por %p55, %p56
      %p58 = scmp.ne.s32.totalorder %s49, %s50
      %p59 = scmp.eq.s32.totalorder %s18, 0
      %p60 = por %p58, %p59
      %p61 = scmp.ne.s32.totalorder %s49, %s50
      %p62 = scmp.eq.s32.totalorder %s19, 1
      %p63 = por %p61, %p62
      %p65 = scmp.ne.s32.totalorder %s50, %s64
      %p66 = scmp.eq.s32.totalorder %s19, 0
      %p67 = por %p65, %p66
      %s69 = sadd.s32 %s68, 1
      %p72 = scmp.eq.s32.totalorder %s13, 1
      %p73 = scmp.ne.s32.totalorder %s68, %s70
      %p74 = scmp.eq.s32.totalorder %s13, 0
      %p75 = por %p73, %p74
      %p76 = scmp.ne.s32.totalorder %s68, %s70
      %p77 = scmp.eq.s32.totalorder %s18, 1
      %p78 = por %p76, %p77
      %p79 = scmp.ne.s32.totalorder %s70, %s71
      %p80 = scmp.eq.s32.totalorder %s18, 0
      %p81 = por %p79, %p80
      %p82 = scmp.ne.s32.totalorder %s70, %s71
      %p83 = scmp.eq.s32.totalorder %s19, 1
      %p84 = por %p82, %p83
      %p86 = scmp.ne.s32.totalorder %s71, %s85
      %p87 = scmp.eq.s32.totalorder %s19, 0
      %p88 = por %p86, %p87
      %s89 = ssub.s32 %s13, %s20
      %p90 = scmp.eq.s32.totalorder %s89, 0
      %s92 = sadd.s32 %s91, 1
      %s93 = scalar_select %p90, %s91, %s92
      %p96 = pneg %p90
      %p97 = scmp.eq.s32.totalorder %s13, 1
      %p98 = por %p96, %p97
      %p99 = scmp.ne.s32.totalorder %s91, %s94
      %p100 = scmp.eq.s32.totalorder %s13, 0
      %p101 = por %p99, %p100
      %p102 = scmp.ne.s32.totalorder %s91, %s94
      %p103 = scmp.eq.s32.totalorder %s18, 1
      %p104 = por %p102, %p103
      %p105 = scmp.ne.s32.totalorder %s94, %s95
      %p106 = scmp.eq.s32.totalorder %s18, 0
      %p107 = por %p105, %p106
      %p108 = scmp.ne.s32.totalorder %s94, %s95
      %p109 = scmp.eq.s32.totalorder %s19, 1
      %p110 = por %p108, %p109
      %p112 = scmp.ne.s32.totalorder %s95, %s111
      %p113 = scmp.eq.s32.totalorder %s19, 0
      %p114 = por %p112, %p113
      %p115 = scmp.le.s32.totalorder 1, %s13
      %p116 = scmp.lt.s32.totalorder %s13, 3
      %p117 = pnand %p115, %p116
      %p118 = pneg %p117
      // Predicated region
      $region9: #{tpu_custom_call.1} parent=5 // pred_check
        _
      $region10: #{tpu_custom_call.1} parent=5 // pred_check_branch
        %120 = sbr.rel (%p117) target = $region12
      $region11: #{tpu_custom_call.1} parent=5 // pred_region
        %s121 = ssub.s32 %s13, 1
        // Predicated region
        $region13: #{tpu_custom_call.1} parent=11 // pred_check
          %p122 = pneg %p60
        $region14: #{tpu_custom_call.1} parent=11 // pred_check_branch
          %124 = sbr.rel (%p122) target = $region16
        $region15: #{tpu_custom_call.1} parent=11 // pred_region
          _
        $region16: #{tpu_custom_call.1} parent=11 // pred_fallthru
          _
        // Predicated region
        $region17: #{tpu_custom_call.1} parent=11 // pred_check
          %p125 = pneg %p81
        $region18: #{tpu_custom_call.1} parent=11 // pred_check_branch
          %127 = sbr.rel (%p125) target = $region20
        $region19: #{tpu_custom_call.1} parent=11 // pred_region
          _
        $region20: #{tpu_custom_call.1} parent=11 // pred_fallthru
          _
      $region12: #{tpu_custom_call.1} parent=5 // pred_fallthru
        _
      %p128 = scmp.lt.s32.totalorder %s13, 2
      // Predicated region
      $region21: #{tpu_custom_call.1} parent=5 // pred_check
        %p129 = pneg %p128
      $region22: #{tpu_custom_call.1} parent=5 // pred_check_branch
        %131 = sbr.rel (%p129) target = $region24
      $region23: #{tpu_custom_call.1} parent=5 // pred_region
        // Predicated region
        $region25: #{tpu_custom_call.1} parent=23 // pred_check
          %p132 = pneg %p33
        $region26: #{tpu_custom_call.1} parent=23 // pred_check_branch
          %134 = sbr.rel (%p132) target = $region28
        $region27: #{tpu_custom_call.1} parent=23 // pred_region
          %s135 = sand.u32 %s23, 1
          %s136 = scalar_lea.sflag [#allocation4], %s135
          %s137 = sand.u32 %s23, 1
          %s138 = smul.addr %s137, 32
          %s139 = scalar_lea.vmem [#allocation3], %s138
          %s140 = smul.u32 2, %s13
          %s141 = ssub.s32 3, %s140
          %p142 = scmp.lt.s32.totalorder %s141, 2
          %s143 = scalar_select %p142, %s141, 2
          %s144 = smul.u32 128, %s143
          %s145 = smul.u32 %s144, 2
          %s147 = ssub.s32 512, %s145
          %148 = vsyncadd %s136, %s147
          %p149 = scmp.ne.s32.totalorder 0, %s145
          %s150 = smul.addr %s140, 2
          %s151 = smul.addr %s150, 128
          %s152 = scalar_lea.hbm %s0, %s151
          %s153 = smul.u32 16, %s143
          %s154 = sshll.u32 %s139, 4
          %s155 = int_to_ptr.vmem [resolvable:$true] %s154
          %s156 = sshll.u32 %s153, 4
          %160 = dma.hbm_to_vmem [thread:$0]  (%p149), %s152, %s156, %s155, %s136, 256, 256, 16
        $region28: #{tpu_custom_call.1} parent=23 // pred_fallthru
          _
      $region24: #{tpu_custom_call.1} parent=5 // pred_fallthru
        _
      %p161 = scmp.le.s32.totalorder 1, %s13
      %p162 = scmp.lt.s32.totalorder %s13, 3
      %p163 = pnand %p161, %p162
      %p164 = pneg %p163
      // Predicated region
      $region29: #{tpu_custom_call.1} parent=5 // pred_check
        _
      $region30: #{tpu_custom_call.1} parent=5 // pred_check_branch
        %166 = sbr.rel (%p163) target = $region32
      $region31: #{tpu_custom_call.1} parent=5 // pred_region
        %s167 = ssub.s32 %s13, 1
        %s168 = sand.u32 %s26, 1
        %s169 = scalar_lea.sflag [#allocation4], %s168
        %s170 = sand.u32 %s26, 1
        %s171 = smul.addr %s170, 32
        %s172 = scalar_lea.vmem [#allocation3], %s171
        // Predicated region
        $region33: #{tpu_custom_call.1} parent=31 // pred_check
          %p173 = pneg %p39
        $region34: #{tpu_custom_call.1} parent=31 // pred_check_branch
          %175 = sbr.rel (%p173) target = $region36
        $region35: #{tpu_custom_call.1} parent=31 // pred_region
          %176 = dma.done %s169, 512
        $region36: #{tpu_custom_call.1} parent=31 // pred_fallthru
          _
        %s177 = sand.u32 %s26, 1
        %s178 = scalar_lea.sflag [#allocation4], %s177
        %s179 = sand.u32 %s26, 1
        %s180 = smul.addr %s179, 32
        %s181 = scalar_lea.vmem [#allocation3], %s180
        %p182 = pneg %p39
        %p183 = pneg %p36
        %p184 = pneg %p60
        %p185 = pneg %p57
        %p186 = pneg %p81
        %p187 = pneg %p78
        %p188 = pneg %p107
        %p189 = pneg %p104
        %s190 = sand.u32 %s94, 1
        %s191 = sand.u32 %s94, 1
        %s192 = smul.addr %s191, 16
        %s193 = scalar_lea.vmem [#allocation5], %s192
        %s194 = smul.u32 2, %s18
        %s195 = ssub.s32 3, %s194
        %p196 = scmp.lt.s32.totalorder %s195, 2
        %s197 = scalar_select %p196, %s195, 2
        %s198 = smul.u32 128, %s197
        %s199 = smul.u32 %s198, 2
        %s200 = smul.u32 2, %s18
        %s201 = ssub.s32 3, %s200
        %p202 = scmp.lt.s32.totalorder %s201, 2
        %s203 = scalar_select %p202, %s201, 2
        %s204 = smul.u32 128, %s203
        %v205 = vld [vmem:[%s172] sm:$0xff]
        %v206 = vld [vmem:[%s172 + $0x8] sm:$0xff]
        %v207 = vld [vmem:[%s172 + $0x10] sm:$0xff]
        %v208 = vld [vmem:[%s172 + $0x18] sm:$0xff]
        %v209 = vld [vmem:[%s1] sm:$0x3]
        %v211 = vlaneseq
        %v212 = vshrl.u32 %v211, 7
        %v213 = vsub.s32 0, %v212
        %v214 = vrot.slane %v209, %v213
        %v215 = vlaneseq
        %v216 = vshrl.u32 %v215, 7
        %v217 = vsub.s32 1, %v216
        %v218 = vrot.slane %v209, %v217
        %v221 = vmul.f32 %v205, %v214
        %v222 = vmul.f32 %v206, %v218
        %v223 = vmul.f32 %v207, %v214
        %v224 = vmul.f32 %v208, %v218
        %vm225 = vcmask 916480
        %v226 = vsel %vm225, %v222, 0.0
        %v227 = vadd.f32 %v221, %v226
        %228 = vadd.xlane.f32.xlu0 %v227
        %v229 = vpop.xlane.xlu0 %228
        %v230 = vsel %vm225, %v224, 0.0
        %v231 = vadd.f32 %v223, %v230
        %232 = vadd.xlane.f32.xlu0 %v231
        %v233 = vpop.xlane.xlu0 %232
        %s234 = sld [smem:[#allocation2]]
        %v235 = vstv %s234
        %v236 = vadd.f32 %v229, %v235
        %v237 = vadd.f32 %v233, %v235
        %vm238 = vcmask 7168
        %239 = vst.msk [vmem:[%s193] sm:$0xff] %vm238, %v236
        %240 = vst.msk [vmem:[%s193 + $0x8] sm:$0xff] %vm238, %v237
        %s241 = sand.u32 %s94, 1
        %s242 = sand.u32 %s94, 1
        %s243 = smul.addr %s242, 16
        %s244 = scalar_lea.vmem [#allocation5], %s243
        // Predicated region
        $region37: #{tpu_custom_call.1} parent=31 // pred_check
          %p245 = pneg %p104
        $region38: #{tpu_custom_call.1} parent=31 // pred_check_branch
          %247 = sbr.rel (%p245) target = $region40
        $region39: #{tpu_custom_call.1} parent=31 // pred_region
          %s248 = smul.u32 2, %s18
          %s249 = ssub.s32 3, %s248
          %p250 = scmp.lt.s32.totalorder %s249, 2
          %s251 = scalar_select %p250, %s249, 2
          %s252 = smul.u32 128, %s251
          %p253 = scmp.ne.s32.totalorder 0, %s252
          %s254 = smul.addr %s248, 8
          %s255 = scalar_lea.vmem %s3, %s254
          // Predicated region
          $region41: #{tpu_custom_call.1} parent=39 // pred_check
            %p256 = pneg %p253
          $region42: #{tpu_custom_call.1} parent=39 // pred_check_branch
            %258 = sbr.rel (%p256) target = $region44
          $region43: #{tpu_custom_call.1} parent=39 // pred_region
            // Predicated region
            $region45: #{tpu_custom_call.1} parent=43 // pred_check
              _
            $region46: #{tpu_custom_call.1} parent=43 // pred_check_branch
              %260 = sbr.rel (0) target = $region48
            $region47: #{tpu_custom_call.1} parent=43 // pred_region
              // Predicated region
              $region67: #{tpu_custom_call.1} parent=47 // pred_check
                _
              $region68: #{tpu_custom_call.1} parent=47 // pred_check_branch
                %311 = sbr.rel (0) target = $region70
              $region69: #{tpu_custom_call.1} parent=47 // pred_region
                %s312 = sshrl.u32 %s251, 1
                // While loop
                $region71: #{tpu_custom_call.1} parent=69 // loop_pre_header
                  _
                $region72: #{tpu_custom_call.1} parent=69 // loop_header
                  %s314 = sphi 0, %s316
                  %p315 = scmp.ge.s32.totalorder %s314, %s312
                  %s319 = sphi 0, %s328
                  %s320 = sphi %s244, %s331
                  %s321 = sphi %s255, %s332
                $region73: #{tpu_custom_call.1} parent=69 // loop_header_branch
                  %318 = sbr.rel (%p315) target = $region77
                $region74: #{tpu_custom_call.1} parent=69 // loop_body
                  %v322 = vld [vmem:[%s320] sm:$0xff]
                  %323 = vst [vmem:[%s321] sm:$0xff] %v322
                  %v324 = vld [vmem:[%s320 + $0x8] sm:$0xff]
                  %325 = vst [vmem:[%s321 + $0x8] sm:$0xff] %v324
                  %s326 = sadd.s32 1, %s319
                  %p327 = scmp.ge.s32.totalorder %s326, %s312
                  %s328 = scalar_select %p327, 0, %s326
                  %s329 = smul.u32 %s328, 16
                  %s330 = smul.u32 %s328, 16
                  %s331 = scalar_lea.vmem %s244, %s329 [#allocation5]
                  %s332 = scalar_lea.vmem %s255, %s330
                $region75: #{tpu_custom_call.1} parent=69 // loop_footer
                  %s316 = sadd.s32 %s314, 1
                $region76: #{tpu_custom_call.1} parent=69 // loop_footer_branch
                  %313 = sbr.rel target = $region72
                $region77: #{tpu_custom_call.1} parent=69 // loop_exit
                  _
                %s333 = sshrl.u32 %s251, 1
                %s334 = sand.u32 %s251, 1
                %s335 = smul.u32 %s333, 2
                %s336 = smul.u32 8, %s335
                %s337 = scalar_lea.vmem %s244, %s336 [#allocation5]
                %s338 = smul.u32 8, %s335
                %s339 = scalar_lea.vmem %s255, %s338
                // While loop
                $region78: #{tpu_custom_call.1} parent=69 // loop_pre_header
                  _
                $region79: #{tpu_custom_call.1} parent=69 // loop_header
                  %s341 = sphi 0, %s343
                  %p342 = scmp.ge.s32.totalorder %s341, %s334
                  %s346 = sphi 0, %s353
                  %s347 = sphi %s337, %s356
                  %s348 = sphi %s339, %s357
                $region80: #{tpu_custom_call.1} parent=69 // loop_header_branch
                  %345 = sbr.rel (%p342) target = $region84
                $region81: #{tpu_custom_call.1} parent=69 // loop_body
                  %v349 = vld [vmem:[%s347] sm:$0xff]
                  %350 = vst [vmem:[%s348] sm:$0xff] %v349
                  %s351 = sadd.s32 1, %s346
                  %p352 = scmp.ge.s32.totalorder %s351, %s334
                  %s353 = scalar_select %p352, 0, %s351
                  %s354 = smul.u32 %s353, 8
                  %s355 = smul.u32 %s353, 8
                  %s356 = scalar_lea.vmem %s337, %s354 [#allocation5]
                  %s357 = scalar_lea.vmem %s339, %s355
                $region82: #{tpu_custom_call.1} parent=69 // loop_footer
                  %s343 = sadd.s32 %s341, 1
                $region83: #{tpu_custom_call.1} parent=69 // loop_footer_branch
                  %340 = sbr.rel target = $region79
                $region84: #{tpu_custom_call.1} parent=69 // loop_exit
                  _
              $region70: #{tpu_custom_call.1} parent=47 // pred_fallthru
                _
              // Predicated region
              $region85: #{tpu_custom_call.1} parent=47 // pred_check
                _
              $region86: #{tpu_custom_call.1} parent=47 // pred_check_branch
                %359 = sbr.rel target = $region88
              $region87: #{tpu_custom_call.1} parent=47 // pred_region
                _
              $region88: #{tpu_custom_call.1} parent=47 // pred_fallthru
                _
            $region48: #{tpu_custom_call.1} parent=43 // pred_fallthru
              _
            // Predicated region
            $region49: #{tpu_custom_call.1} parent=43 // pred_check
              _
            $region50: #{tpu_custom_call.1} parent=43 // pred_check_branch
              %262 = sbr.rel target = $region52
            $region51: #{tpu_custom_call.1} parent=43 // pred_region
              %s264 = sshrl.u32 %s251, 1
              // While loop
              $region53: #{tpu_custom_call.1} parent=51 // loop_pre_header
                _
              $region54: #{tpu_custom_call.1} parent=51 // loop_header
                %s266 = sphi 0, %s268
                %p267 = scmp.ge.s32.totalorder %s266, %s264
                %s271 = sphi 0, %s280
                %s272 = sphi %s244, %s283
                %s273 = sphi %s255, %s284
              $region55: #{tpu_custom_call.1} parent=51 // loop_header_branch
                %270 = sbr.rel (%p267) target = $region59
              $region56: #{tpu_custom_call.1} parent=51 // loop_body
                %v274 = vld [vmem:[%s272] sm:$0xff]
                %275 = vst [vmem:[%s273] sm:$0xff] %v274
                %v276 = vld [vmem:[%s272 + $0x8] sm:$0xff]
                %277 = vst [vmem:[%s273 + $0x8] sm:$0xff] %v276
                %s278 = sadd.s32 1, %s271
                %p279 = scmp.ge.s32.totalorder %s278, %s264
                %s280 = scalar_select %p279, 0, %s278
                %s281 = smul.u32 %s280, 16
                %s282 = smul.u32 %s280, 16
                %s283 = scalar_lea.vmem %s244, %s281 [#allocation5]
                %s284 = scalar_lea.vmem %s255, %s282
              $region57: #{tpu_custom_call.1} parent=51 // loop_footer
                %s268 = sadd.s32 %s266, 1
              $region58: #{tpu_custom_call.1} parent=51 // loop_footer_branch
                %265 = sbr.rel target = $region54
              $region59: #{tpu_custom_call.1} parent=51 // loop_exit
                _
              %s285 = sshrl.u32 %s251, 1
              %s286 = sand.u32 %s251, 1
              %s287 = smul.u32 %s285, 2
              %s288 = smul.u32 8, %s287
              %s289 = scalar_lea.vmem %s244, %s288 [#allocation5]
              %s290 = smul.u32 8, %s287
              %s291 = scalar_lea.vmem %s255, %s290
              // While loop
              $region60: #{tpu_custom_call.1} parent=51 // loop_pre_header
                _
              $region61: #{tpu_custom_call.1} parent=51 // loop_header
                %s293 = sphi 0, %s295
                %p294 = scmp.ge.s32.totalorder %s293, %s286
                %s298 = sphi 0, %s305
                %s299 = sphi %s289, %s308
                %s300 = sphi %s291, %s309
              $region62: #{tpu_custom_call.1} parent=51 // loop_header_branch
                %297 = sbr.rel (%p294) target = $region66
              $region63: #{tpu_custom_call.1} parent=51 // loop_body
                %v301 = vld [vmem:[%s299] sm:$0xff]
                %302 = vst [vmem:[%s300] sm:$0xff] %v301
                %s303 = sadd.s32 1, %s298
                %p304 = scmp.ge.s32.totalorder %s303, %s286
                %s305 = scalar_select %p304, 0, %s303
                %s306 = smul.u32 %s305, 8
                %s307 = smul.u32 %s305, 8
                %s308 = scalar_lea.vmem %s289, %s306 [#allocation5]
                %s309 = scalar_lea.vmem %s291, %s307
              $region64: #{tpu_custom_call.1} parent=51 // loop_footer
                %s295 = sadd.s32 %s293, 1
              $region65: #{tpu_custom_call.1} parent=51 // loop_footer_branch
                %292 = sbr.rel target = $region61
              $region66: #{tpu_custom_call.1} parent=51 // loop_exit
                _
            $region52: #{tpu_custom_call.1} parent=43 // pred_fallthru
              _
          $region44: #{tpu_custom_call.1} parent=39 // pred_fallthru
            _
          %360 = vnop
        $region40: #{tpu_custom_call.1} parent=31 // pred_fallthru
          _
      $region32: #{tpu_custom_call.1} parent=5 // pred_fallthru
        _
      %p361 = scmp.le.s32.totalorder 2, %s13
      // Predicated region
      $region89: #{tpu_custom_call.1} parent=5 // pred_check
        %p362 = pneg %p361
      $region90: #{tpu_custom_call.1} parent=5 // pred_check_branch
        %364 = sbr.rel (%p362) target = $region92
      $region91: #{tpu_custom_call.1} parent=5 // pred_region
        %s365 = ssub.s32 %s13, 2
        // Predicated region
        $region93: #{tpu_custom_call.1} parent=91 // pred_check
          %p366 = pneg %p110
        $region94: #{tpu_custom_call.1} parent=91 // pred_check_branch
          %368 = sbr.rel (%p366) target = $region96
        $region95: #{tpu_custom_call.1} parent=91 // pred_region
          %s369 = sand.u32 %s95, 1
          %s370 = sand.u32 %s95, 1
          %s371 = smul.addr %s370, 16
          %s372 = scalar_lea.vmem [#allocation5], %s371
        $region96: #{tpu_custom_call.1} parent=91 // pred_fallthru
          _
      $region92: #{tpu_custom_call.1} parent=5 // pred_fallthru
        _
    $region6: #{tpu_custom_call.1} parent=1 // loop_footer
      %s17 = sadd.s32 1, %s13
    $region7: #{tpu_custom_call.1} parent=1 // loop_footer_branch
      %12 = sbr.rel target = $region3
    $region8: #{tpu_custom_call.1} parent=1 // loop_exit
      _
    %373 = vsyncpa [#allocation4], 1
    %s374 = scalar_lea.sflag [#allocation4], 1
    %375 = vsyncpa %s374, 1

</llo_original>
